<compile_context>
chip_gen: v7x
topology: tpu7x:2x2x1
jax: 0.10.0
libtpu: 0.0.40
codegen_flags: <defaults>
</compile_context>

<pallas_src>
import jax
import jax.numpy as jnp
from jax.experimental import pallas as pl
from jax.experimental.pallas import tpu as pltpu

LANE = 128           # TPU vreg lane width
MAX_COLS = 32768     # max lane-columns per grid step (~6 MiB double-buffered)


def mlp_kernel(w1_ref, b1_ref, w2_ref, b2_ref, x_ref, o_ref):
    # x_ref: (2*S, TC) VMEM block; rows [0:S) = feature 0, rows [S:2S) = feature 1.
    # o_ref: (S, TC) VMEM block (S = 8 folded path, S = 1 fallback path).
    # w1_ref: (8,) SMEM (row-major flatten of (2,4)), b1_ref: (4,),
    # w2_ref: (4,), b2_ref: (1,) -- scalars read from SMEM.
    s = o_ref.shape[0]
    x0 = x_ref[0:s, :]                   # (S, TC) feature 0
    x1 = x_ref[s:2 * s, :]               # (S, TC) feature 1
    acc = None
    # Hidden dim = 4, fully unrolled: pure VPU fmas, scalar weights splatted.
    for j in range(4):
        h_j = x0 * w1_ref[j] + x1 * w1_ref[4 + j] + b1_ref[j]
        h_j = jnp.maximum(h_j, 0.0)      # ReLU (layer 1)
        term = h_j * w2_ref[j]
        acc = term if acc is None else acc + term
    o_ref[...] = jnp.maximum(acc + b2_ref[0], 0.0)   # ReLU (layer 2)


def _round_up(a, m):
    return ((a + m - 1) // m) * m


def net_forward(x, w1, b1, w2, b2, *, block_b=262144):
    """x: (B, 2). w1: (2, 4), b1: (4,), w2: (4, 1), b2: (1,).
    Returns (B, 1) float32 = relu(relu(x @ w1 + b1) @ w2 + b2)."""
    B = x.shape[0]
    x = x.astype(jnp.float32)

    # Fold batch onto 8 sublanes when possible (dense sublanes); otherwise
    # fall back to the lane-only layout.  The transpose + reshape below is a
    # single fused XLA copy pass (the reshape of the transposed array is a
    # free contiguous reshape).
    fold = 8 if B % 8 == 0 else 1
    ncols = B // fold
    xt = x.T.reshape(2 * fold, ncols)

    # Lane-column tile: as large as possible (amortize per-step overhead)
    # while staying well under default scoped VMEM on every generation.
    if ncols <= LANE:
        tcols = ncols                              # single full-width block
    else:
        target = max(LANE, (min(block_b // fold, MAX_COLS) // LANE) * LANE)
        tcols = min(target, (ncols // LANE) * LANE)
        if pl.cdiv(ncols, tcols) == 1:
            # Split into >=2 steps so the "parallel" axis feeds both v7x TCs.
            tcols = min(_round_up(pl.cdiv(ncols, 2), LANE),
                        (ncols // LANE) * LANE)
    grid = (pl.cdiv(ncols, tcols),)                # ragged last block is OK

    cost = pl.CostEstimate(
        flops=2 * B * (2 * 4 + 4 * 1),
        transcendentals=0,
        bytes_accessed=4 * B * (2 + 1) + 4 * (8 + 4 + 4 + 1),
    )

    out = pl.pallas_call(
        mlp_kernel,
        out_shape=jax.ShapeDtypeStruct((fold, ncols), jnp.float32),
        grid=grid,
        in_specs=[
            pl.BlockSpec(memory_space=pltpu.MemorySpace.SMEM),   # w1 flat (8,)
            pl.BlockSpec(memory_space=pltpu.MemorySpace.SMEM),   # b1 (4,)
            pl.BlockSpec(memory_space=pltpu.MemorySpace.SMEM),   # w2 flat (4,)
            pl.BlockSpec(memory_space=pltpu.MemorySpace.SMEM),   # b2 (1,)
            pl.BlockSpec((2 * fold, tcols), lambda i: (0, i)),   # x tile
        ],
        out_specs=pl.BlockSpec((fold, tcols), lambda i: (0, i)),  # dense out
        compiler_params=pltpu.CompilerParams(
            dimension_semantics=("parallel",)),
        cost_estimate=cost,
    )(
        w1.reshape(-1).astype(jnp.float32),
        b1.reshape(-1).astype(jnp.float32),
        w2.reshape(-1).astype(jnp.float32),
        b2.reshape(-1).astype(jnp.float32),
        xt,
    )
    # Row-major flatten of (fold, ncols) restores batch order; free reshape.
    return out.reshape(B, 1)


def init_params(key):
    """Deterministic init mirroring PyTorch nn.Linear default:
    U(-1/sqrt(fan_in), 1/sqrt(fan_in)). Weights stored (F_in, F_out),
    i.e. transposed relative to PyTorch's (F_out, F_in)."""
    k1, k2, k3, k4 = jax.random.split(key, 4)
    bound1 = 1.0 / jnp.sqrt(2.0)   # fc1: fan_in = 2
    bound2 = 1.0 / jnp.sqrt(4.0)   # fc2: fan_in = 4
    w1 = jax.random.uniform(k1, (2, 4), jnp.float32, -bound1, bound1)
    b1 = jax.random.uniform(k2, (4,), jnp.float32, -bound1, bound1)
    w2 = jax.random.uniform(k3, (4, 1), jnp.float32, -bound2, bound2)
    b2 = jax.random.uniform(k4, (1,), jnp.float32, -bound2, bound2)
    return w1, b1, w2, b2


def _reference(x, w1, b1, w2, b2):
    h = jnp.maximum(x @ w1 + b1, 0.0)
    return jnp.maximum(h @ w2 + b2, 0.0)


if __name__ == "__main__":
    key = jax.random.PRNGKey(0)
    pkey, k1, k2, k3 = jax.random.split(key, 4)
    w1, b1, w2, b2 = init_params(pkey)

    # Small batch (folded sublane path, single tile).
    x = jax.random.normal(k1, (8, 2), jnp.float32)
    out = jax.block_until_ready(net_forward(x, w1, b1, w2, b2))
    ref = _reference(x, w1, b1, w2, b2)
    assert out.shape == (8, 1)
    assert jnp.allclose(out, ref, atol=1e-5), "mismatch vs reference (B=8)"

    # Folded path with a multi-step grid and a ragged final block.
    x2 = jax.random.normal(k2, (2056, 2), jnp.float32)
    out2 = jax.block_until_ready(net_forward(x2, w1, b1, w2, b2, block_b=1024))
    ref2 = _reference(x2, w1, b1, w2, b2)
    assert out2.shape == (2056, 1)
    assert jnp.allclose(out2, ref2, atol=1e-5), "mismatch vs reference (B=2056)"

    # Fallback lane-only path (B not a multiple of 8), ragged final block.
    x3 = jax.random.normal(k3, (1003, 2), jnp.float32)
    out3 = jax.block_until_ready(net_forward(x3, w1, b1, w2, b2, block_b=2048))
    ref3 = _reference(x3, w1, b1, w2, b2)
    assert out3.shape == (1003, 1)
    assert jnp.allclose(out3, ref3, atol=1e-5), "mismatch vs reference (B=1003)"

    print("KERNEL_OK")
</pallas_src>

<mosaic_0001>
module attributes {stable_mosaic.version = 11 : i64} {
  func.func @mlp_kernel(%arg0: i32, %arg1: memref<8xf32, #tpu.memory_space<smem>>, %arg2: memref<4xf32, #tpu.memory_space<smem>>, %arg3: memref<4xf32, #tpu.memory_space<smem>>, %arg4: memref<1xf32, #tpu.memory_space<smem>>, %arg5: memref<16x1xf32, #tpu.memory_space<vmem>>, %arg6: memref<8x1xf32, #tpu.memory_space<vmem>>) attributes {dimension_semantics = [#tpu.dimension_semantics<parallel>], iteration_bounds = array<i64: 1>, scalar_prefetch = 0 : i64, scratch_operands = 0 : i64, tpu.core_type = #tpu.core_type<tc>, window_params = [{transform_indices = @transform_0, window_bounds = array<i64: 8>}, {transform_indices = @transform_1, window_bounds = array<i64: 4>}, {transform_indices = @transform_2, window_bounds = array<i64: 4>}, {transform_indices = @transform_3, window_bounds = array<i64: 1>}, {transform_indices = @transform_4, window_bounds = array<i64: 16, 1>}, {transform_indices = @transform_5, window_bounds = array<i64: 8, 1>}]} {
    %c0 = arith.constant 0 : index
    %c0_0 = arith.constant 0 : index
    %0 = vector.load %arg5[%c0, %c0_0] : memref<16x1xf32, #tpu.memory_space<vmem>>, vector<8x1xf32>
    %c8 = arith.constant 8 : index
    %c0_1 = arith.constant 0 : index
    %1 = vector.load %arg5[%c8, %c0_1] : memref<16x1xf32, #tpu.memory_space<vmem>>, vector<8x1xf32>
    %c0_2 = arith.constant 0 : index
    %2 = memref.load %arg1[%c0_2] : memref<8xf32, #tpu.memory_space<smem>>
    %3 = vector.broadcast %2 : f32 to vector<8x1xf32>
    %4 = arith.mulf %0, %3 : vector<8x1xf32>
    %c4 = arith.constant 4 : index
    %5 = memref.load %arg1[%c4] : memref<8xf32, #tpu.memory_space<smem>>
    %6 = vector.broadcast %5 : f32 to vector<8x1xf32>
    %7 = arith.mulf %1, %6 : vector<8x1xf32>
    %8 = arith.addf %4, %7 : vector<8x1xf32>
    %c0_3 = arith.constant 0 : index
    %9 = memref.load %arg2[%c0_3] : memref<4xf32, #tpu.memory_space<smem>>
    %10 = vector.broadcast %9 : f32 to vector<8x1xf32>
    %11 = arith.addf %8, %10 : vector<8x1xf32>
    %cst = arith.constant 0.000000e+00 : f32
    %12 = vector.broadcast %cst : f32 to vector<8x1xf32>
    %13 = arith.maximumf %11, %12 : vector<8x1xf32>
    %c0_4 = arith.constant 0 : index
    %14 = memref.load %arg3[%c0_4] : memref<4xf32, #tpu.memory_space<smem>>
    %15 = vector.broadcast %14 : f32 to vector<8x1xf32>
    %16 = arith.mulf %13, %15 : vector<8x1xf32>
    %c1 = arith.constant 1 : index
    %17 = memref.load %arg1[%c1] : memref<8xf32, #tpu.memory_space<smem>>
    %18 = vector.broadcast %17 : f32 to vector<8x1xf32>
    %19 = arith.mulf %0, %18 : vector<8x1xf32>
    %c5 = arith.constant 5 : index
    %20 = memref.load %arg1[%c5] : memref<8xf32, #tpu.memory_space<smem>>
    %21 = vector.broadcast %20 : f32 to vector<8x1xf32>
    %22 = arith.mulf %1, %21 : vector<8x1xf32>
    %23 = arith.addf %19, %22 : vector<8x1xf32>
    %c1_5 = arith.constant 1 : index
    %24 = memref.load %arg2[%c1_5] : memref<4xf32, #tpu.memory_space<smem>>
    %25 = vector.broadcast %24 : f32 to vector<8x1xf32>
    %26 = arith.addf %23, %25 : vector<8x1xf32>
    %cst_6 = arith.constant 0.000000e+00 : f32
    %27 = vector.broadcast %cst_6 : f32 to vector<8x1xf32>
    %28 = arith.maximumf %26, %27 : vector<8x1xf32>
    %c1_7 = arith.constant 1 : index
    %29 = memref.load %arg3[%c1_7] : memref<4xf32, #tpu.memory_space<smem>>
    %30 = vector.broadcast %29 : f32 to vector<8x1xf32>
    %31 = arith.mulf %28, %30 : vector<8x1xf32>
    %32 = arith.addf %16, %31 : vector<8x1xf32>
    %c2 = arith.constant 2 : index
    %33 = memref.load %arg1[%c2] : memref<8xf32, #tpu.memory_space<smem>>
    %34 = vector.broadcast %33 : f32 to vector<8x1xf32>
    %35 = arith.mulf %0, %34 : vector<8x1xf32>
    %c6 = arith.constant 6 : index
    %36 = memref.load %arg1[%c6] : memref<8xf32, #tpu.memory_space<smem>>
    %37 = vector.broadcast %36 : f32 to vector<8x1xf32>
    %38 = arith.mulf %1, %37 : vector<8x1xf32>
    %39 = arith.addf %35, %38 : vector<8x1xf32>
    %c2_8 = arith.constant 2 : index
    %40 = memref.load %arg2[%c2_8] : memref<4xf32, #tpu.memory_space<smem>>
    %41 = vector.broadcast %40 : f32 to vector<8x1xf32>
    %42 = arith.addf %39, %41 : vector<8x1xf32>
    %cst_9 = arith.constant 0.000000e+00 : f32
    %43 = vector.broadcast %cst_9 : f32 to vector<8x1xf32>
    %44 = arith.maximumf %42, %43 : vector<8x1xf32>
    %c2_10 = arith.constant 2 : index
    %45 = memref.load %arg3[%c2_10] : memref<4xf32, #tpu.memory_space<smem>>
    %46 = vector.broadcast %45 : f32 to vector<8x1xf32>
    %47 = arith.mulf %44, %46 : vector<8x1xf32>
    %48 = arith.addf %32, %47 : vector<8x1xf32>
    %c3 = arith.constant 3 : index
    %49 = memref.load %arg1[%c3] : memref<8xf32, #tpu.memory_space<smem>>
    %50 = vector.broadcast %49 : f32 to vector<8x1xf32>
    %51 = arith.mulf %0, %50 : vector<8x1xf32>
    %c7 = arith.constant 7 : index
    %52 = memref.load %arg1[%c7] : memref<8xf32, #tpu.memory_space<smem>>
    %53 = vector.broadcast %52 : f32 to vector<8x1xf32>
    %54 = arith.mulf %1, %53 : vector<8x1xf32>
    %55 = arith.addf %51, %54 : vector<8x1xf32>
    %c3_11 = arith.constant 3 : index
    %56 = memref.load %arg2[%c3_11] : memref<4xf32, #tpu.memory_space<smem>>
    %57 = vector.broadcast %56 : f32 to vector<8x1xf32>
    %58 = arith.addf %55, %57 : vector<8x1xf32>
    %cst_12 = arith.constant 0.000000e+00 : f32
    %59 = vector.broadcast %cst_12 : f32 to vector<8x1xf32>
    %60 = arith.maximumf %58, %59 : vector<8x1xf32>
    %c3_13 = arith.constant 3 : index
    %61 = memref.load %arg3[%c3_13] : memref<4xf32, #tpu.memory_space<smem>>
    %62 = vector.broadcast %61 : f32 to vector<8x1xf32>
    %63 = arith.mulf %60, %62 : vector<8x1xf32>
    %64 = arith.addf %48, %63 : vector<8x1xf32>
    %c0_14 = arith.constant 0 : index
    %65 = memref.load %arg4[%c0_14] : memref<1xf32, #tpu.memory_space<smem>>
    %66 = vector.broadcast %65 : f32 to vector<8x1xf32>
    %67 = arith.addf %64, %66 : vector<8x1xf32>
    %cst_15 = arith.constant 0.000000e+00 : f32
    %68 = vector.broadcast %cst_15 : f32 to vector<8x1xf32>
    %69 = arith.maximumf %67, %68 : vector<8x1xf32>
    %c0_16 = arith.constant 0 : index
    %c0_17 = arith.constant 0 : index
    %70 = vector.load %arg6[%c0_16, %c0_17] : memref<8x1xf32, #tpu.memory_space<vmem>>, vector<8x1xf32>
    tpu.vector_store %arg6[%c0_16, %c0_17], %69 {strides = array<i32>} : memref<8x1xf32, #tpu.memory_space<vmem>>, vector<8x1xf32>,
    return
  }
  func.func @transform_0(%arg0: i32) -> i32 {
    %c0_i32 = arith.constant 0 : i32
    %c0_i32_0 = arith.constant 0 : i32
    return %c0_i32 : i32
  }
  func.func @transform_1(%arg0: i32) -> i32 {
    %c0_i32 = arith.constant 0 : i32
    %c0_i32_0 = arith.constant 0 : i32
    return %c0_i32 : i32
  }
  func.func @transform_2(%arg0: i32) -> i32 {
    %c0_i32 = arith.constant 0 : i32
    %c0_i32_0 = arith.constant 0 : i32
    return %c0_i32 : i32
  }
  func.func @transform_3(%arg0: i32) -> i32 {
    %c0_i32 = arith.constant 0 : i32
    %c0_i32_0 = arith.constant 0 : i32
    return %c0_i32 : i32
  }
  func.func @transform_4(%arg0: i32) -> (i32, i32) {
    %c0_i32 = arith.constant 0 : i32
    %c0_i32_0 = arith.constant 0 : i32
    return %c0_i32, %arg0 : i32, i32
  }
  func.func @transform_5(%arg0: i32) -> (i32, i32) {
    %c0_i32 = arith.constant 0 : i32
    %c0_i32_0 = arith.constant 0 : i32
    return %c0_i32, %arg0 : i32, i32
  }
}

</mosaic_0001>

<llo_original>
// kernel: tpu_custom_call.1
$region0: #{tpu_custom_call.1}
  #allocation0 [shape = 'u32[]', space=smem, size = 0x4, offset = 0x4, fixed_abs, tag = 'smem constant byte address 0x4 - core index']
  #allocation1 [shape = 'u32[144,128]{1,0:T(1,128)}', space=vmem, size = 0x12000, scoped, tag = 'internal scratch']
  #allocation2 [shape = 'f32[1]{0:T(128)S(6)}', space=smem, size = 0x200, scoped, tag = 'scoped memory for tpu_custom_call.1']
  %s0 = inlined_call_operand.vmem [shape: f32[8], index: 0, kind: input, shape index: {}]
  %s1 = inlined_call_operand.vmem [shape: f32[4], index: 1, kind: input, shape index: {}]
  %s2 = inlined_call_operand.vmem [shape: f32[4], index: 2, kind: input, shape index: {}]
  %s3 = inlined_call_operand.<no memory space> [shape: f32[1], index: 3, kind: input, shape index: {}]
  %s4 = inlined_call_operand.vmem [shape: f32[16,1], index: 4, kind: input, shape index: {}]
  %s5 = inlined_call_operand.vmem [shape: f32[8,1], index: 5, kind: output, shape index: {}]
  %s6 = sld [smem:[#allocation0]]
  $region42: #{tpu_custom_call.1} parent=0
    _
  %s8 = ssub.s32 1, %s6
  %s9 = scalar_select 0, %s8, %s6
  %10 = sst [smem:[#allocation2]] %s3
  $region1: #{tpu_custom_call.1} parent=0
    #allocation3 [shape = 'u8[512]{0}', space=smem, size = 0x200, scoped, tag = 'input window, operand 0, single buffered']
    #allocation4 [shape = 's32[1]{0}', space=sflag, size = 0x4, scoped, tag = 'scoped memory for tpu_custom_call.1']
    #allocation5 [shape = 'u8[512]{0}', space=smem, size = 0x200, scoped, tag = 'input window, operand 1, single buffered']
    #allocation6 [shape = 's32[1]{0}', space=sflag, size = 0x4, scoped, tag = 'scoped memory for tpu_custom_call.1']
    #allocation7 [shape = 'u8[512]{0}', space=smem, size = 0x200, scoped, tag = 'input window, operand 2, single buffered']
    %11 = vsyncpa [#allocation4], 0
    %12 = vsyncpa [#allocation6], 0
    // Predicated region
    $region2: #{tpu_custom_call.1} parent=1 // pred_check
      _
    $region3: #{tpu_custom_call.1} parent=1 // pred_check_branch
      %14 = sbr.rel (0) target = $region5
    $region4: #{tpu_custom_call.1} parent=1 // pred_region
      %s16 = ssub.s32 16, 16
      %17 = vsyncadd [#allocation4], %s16
      %s19 = sshll.u32 %s0, 4
      %s20 = int_to_ptr.vmem [resolvable:$true] %s19
      %22 = dma.vmem_to_smem %s20, 16, [#allocation3], [#allocation4]
    $region5: #{tpu_custom_call.1} parent=1 // pred_fallthru
      _
    // Predicated region
    $region6: #{tpu_custom_call.1} parent=1 // pred_check
      _
    $region7: #{tpu_custom_call.1} parent=1 // pred_check_branch
      %24 = sbr.rel (0) target = $region9
    $region8: #{tpu_custom_call.1} parent=1 // pred_region
      %s26 = ssub.s32 16, 16
      %27 = vsyncadd [#allocation6], %s26
      %s29 = sshll.u32 %s1, 4
      %s30 = int_to_ptr.vmem [resolvable:$true] %s29
      %32 = dma.vmem_to_smem %s30, 16, [#allocation5], [#allocation6]
    $region9: #{tpu_custom_call.1} parent=1 // pred_fallthru
      _
    // Predicated region
    $region10: #{tpu_custom_call.1} parent=1 // pred_check
      _
    $region11: #{tpu_custom_call.1} parent=1 // pred_check_branch
      %34 = sbr.rel (0) target = $region13
    $region12: #{tpu_custom_call.1} parent=1 // pred_region
      %s36 = ssub.s32 16, 16
      %37 = vsyncadd [#allocation6], %s36
      %s39 = sshll.u32 %s2, 4
      %s40 = int_to_ptr.vmem [resolvable:$true] %s39
      %42 = dma.vmem_to_smem %s40, 16, [#allocation7], [#allocation6]
    $region13: #{tpu_custom_call.1} parent=1 // pred_fallthru
      _
    // Predicated region
    $region14: #{tpu_custom_call.1} parent=1 // pred_check
      _
    $region15: #{tpu_custom_call.1} parent=1 // pred_check_branch
      %44 = sbr.rel (0) target = $region17
    $region16: #{tpu_custom_call.1} parent=1 // pred_region
      _
    $region17: #{tpu_custom_call.1} parent=1 // pred_fallthru
      _
    // Predicated region
    $region18: #{tpu_custom_call.1} parent=1 // pred_check
      _
    $region19: #{tpu_custom_call.1} parent=1 // pred_check_branch
      %46 = sbr.rel (0) target = $region21
    $region20: #{tpu_custom_call.1} parent=1 // pred_region
      _
    $region21: #{tpu_custom_call.1} parent=1 // pred_fallthru
      _
    // Predicated region
    $region22: #{tpu_custom_call.1} parent=1 // pred_check
      _
    $region23: #{tpu_custom_call.1} parent=1 // pred_check_branch
      %48 = sbr.rel (0) target = $region25
    $region24: #{tpu_custom_call.1} parent=1 // pred_region
      %49 = dma.done [#allocation4], 16
    $region25: #{tpu_custom_call.1} parent=1 // pred_fallthru
      _
    // Predicated region
    $region26: #{tpu_custom_call.1} parent=1 // pred_check
      _
    $region27: #{tpu_custom_call.1} parent=1 // pred_check_branch
      %51 = sbr.rel (0) target = $region29
    $region28: #{tpu_custom_call.1} parent=1 // pred_region
      %52 = dma.done [#allocation6], 16
    $region29: #{tpu_custom_call.1} parent=1 // pred_fallthru
      _
    // Predicated region
    $region30: #{tpu_custom_call.1} parent=1 // pred_check
      _
    $region31: #{tpu_custom_call.1} parent=1 // pred_check_branch
      %54 = sbr.rel (0) target = $region33
    $region32: #{tpu_custom_call.1} parent=1 // pred_region
      %55 = dma.done [#allocation6], 16
    $region33: #{tpu_custom_call.1} parent=1 // pred_fallthru
      _
    %56 = sfence
    %v57 = vld [vmem:[%s4] sm:$0xff]
    %v58 = vld [vmem:[%s4 + $0x8] sm:$0xff]
    %s59 = sld [smem:[#allocation3]]
    %v60 = vstv %s59
    %v61 = vmul.f32 %v57, %v60
    %s62 = sld [smem:[#allocation3 + $0x4]]
    %v63 = vstv %s62
    %v64 = vmul.f32 %v58, %v63
    %v65 = vadd.f32 %v61, %v64
    %s66 = sld [smem:[#allocation5]]
    %v67 = vstv %s66
    %v68 = vadd.f32 %v65, %v67
    %v69 = vmax.f32 %v68, 0.0
    %s70 = sld [smem:[#allocation7]]
    %v71 = vstv %s70
    %v72 = vmul.f32 %v69, %v71
    %s73 = sld [smem:[#allocation3 + $0x1]]
    %v74 = vstv %s73
    %v75 = vmul.f32 %v57, %v74
    %s76 = sld [smem:[#allocation3 + $0x5]]
    %v77 = vstv %s76
    %v78 = vmul.f32 %v58, %v77
    %v79 = vadd.f32 %v75, %v78
    %s80 = sld [smem:[#allocation5 + $0x1]]
    %v81 = vstv %s80
    %v82 = vadd.f32 %v79, %v81
    %v83 = vmax.f32 %v82, 0.0
    %s84 = sld [smem:[#allocation7 + $0x1]]
    %v85 = vstv %s84
    %v86 = vmul.f32 %v83, %v85
    %v87 = vadd.f32 %v72, %v86
    %s88 = sld [smem:[#allocation3 + $0x2]]
    %v89 = vstv %s88
    %v90 = vmul.f32 %v57, %v89
    %s91 = sld [smem:[#allocation3 + $0x6]]
    %v92 = vstv %s91
    %v93 = vmul.f32 %v58, %v92
    %v94 = vadd.f32 %v90, %v93
    %s95 = sld [smem:[#allocation5 + $0x2]]
    %v96 = vstv %s95
    %v97 = vadd.f32 %v94, %v96
    %v98 = vmax.f32 %v97, 0.0
    %s99 = sld [smem:[#allocation7 + $0x2]]
    %v100 = vstv %s99
    %v101 = vmul.f32 %v98, %v100
    %v102 = vadd.f32 %v87, %v101
    %s103 = sld [smem:[#allocation3 + $0x3]]
    %v104 = vstv %s103
    %v105 = vmul.f32 %v57, %v104
    %s106 = sld [smem:[#allocation3 + $0x7]]
    %v107 = vstv %s106
    %v108 = vmul.f32 %v58, %v107
    %v109 = vadd.f32 %v105, %v108
    %s110 = sld [smem:[#allocation5 + $0x3]]
    %v111 = vstv %s110
    %v112 = vadd.f32 %v109, %v111
    %v113 = vmax.f32 %v112, 0.0
    %s114 = sld [smem:[#allocation7 + $0x3]]
    %v115 = vstv %s114
    %v116 = vmul.f32 %v113, %v115
    %v117 = vadd.f32 %v102, %v116
    %s118 = sld [smem:[#allocation2]]
    %v119 = vstv %s118
    %v120 = vadd.f32 %v117, %v119
    %v121 = vmax.f32 %v120, 0.0
    %vm122 = vcmask 7168
    %123 = vst.msk [vmem:[%s5] sm:$0xff] %vm122, %v121
    // Predicated region
    $region34: #{tpu_custom_call.1} parent=1 // pred_check
      _
    $region35: #{tpu_custom_call.1} parent=1 // pred_check_branch
      %125 = sbr.rel (0) target = $region37
    $region36: #{tpu_custom_call.1} parent=1 // pred_region
      _
    $region37: #{tpu_custom_call.1} parent=1 // pred_fallthru
      _
    // Predicated region
    $region38: #{tpu_custom_call.1} parent=1 // pred_check
      _
    $region39: #{tpu_custom_call.1} parent=1 // pred_check_branch
      %127 = sbr.rel (0) target = $region41
    $region40: #{tpu_custom_call.1} parent=1 // pred_region
      _
    $region41: #{tpu_custom_call.1} parent=1 // pred_fallthru
      _
    %128 = vsyncpa [#allocation4], 1
    %129 = vsyncpa [#allocation6], 1

</llo_original>
